<compile_context>
chip_gen: v7x
topology: tpu7x:2x2x1
jax: 0.10.0
libtpu: 0.0.40
codegen_flags: <defaults>
</compile_context>

<pallas_src>
import functools

import jax
import jax.numpy as jnp
from jax.experimental import pallas as pl
from jax.experimental.pallas import tpu as pltpu

EPS = 1e-5


# --------------------------------------------------------------------------
# Kernels
# --------------------------------------------------------------------------
def _lane_group_sum(x2d, groups, group_width):
    """Sum a (TB, C) stats row across its G lane groups of width E (C = G*E).

    After the contiguous fold, lane g*E + e holds a partial statistic of channel
    e; the G-1 rolls broadcast the full channel sum back to every lane.  The
    rolls run on the XLU, which has slack in this VPU/memory-bound kernel.
    """
    if groups == 1:
        return x2d
    total = x2d
    for k in range(1, groups):
        total = total + pltpu.roll(x2d, shift=k * group_width, axis=1)
    return total


def _fused_kernel(x1_ref, x2_ref, w_ref, b_ref, o_ref, *, groups, group_width):
    # x1_ref / x2_ref / o_ref : (TB, M, TC) block, full reduction axis resident.
    # w_ref / b_ref           : (1, TC) affine parameters (already group-tiled).
    a = x1_ref[...].astype(jnp.float32) + x2_ref[...].astype(jnp.float32)
    n_total = a.shape[1] * groups
    inv_n = 1.0 / n_total

    s = _lane_group_sum(jnp.sum(a, axis=1), groups, group_width)        # (TB, TC)
    mean = (s * inv_n)[:, None, :]                                      # (TB, 1, TC)
    d = a - mean                                                        # two-pass stats
    ss = _lane_group_sum(jnp.sum(d * d, axis=1), groups, group_width)   # (TB, TC)
    inv = jax.lax.rsqrt(ss * inv_n + EPS)[:, None, :]                   # (TB, 1, TC)

    w = w_ref[...].astype(jnp.float32).reshape(1, 1, -1)
    b = b_ref[...].astype(jnp.float32).reshape(1, 1, -1)
    o_ref[...] = (d * (inv * w) + b).astype(o_ref.dtype)


def _stats_kernel(x1_ref, x2_ref, sum_ref, ssq_ref):
    # Sweep 1 of the large-N fallback: accumulate sum / sumsq over the N axis.
    # sum_ref / ssq_ref blocks are (TB, 1, TC), resident across the last grid axis.
    k = pl.program_id(2)

    @pl.when(k == 0)
    def _():
        sum_ref[...] = jnp.zeros_like(sum_ref)
        ssq_ref[...] = jnp.zeros_like(ssq_ref)

    a = x1_ref[...].astype(jnp.float32) + x2_ref[...].astype(jnp.float32)
    sum_ref[...] += jnp.sum(a, axis=1, keepdims=True)
    ssq_ref[...] += jnp.sum(a * a, axis=1, keepdims=True)


def _apply_kernel(x1_ref, x2_ref, sum_ref, ssq_ref, w_ref, b_ref, o_ref, *,
                  groups, group_width, n_total):
    # Sweep 2 of the large-N fallback: re-read inputs and normalize.
    a = x1_ref[...].astype(jnp.float32) + x2_ref[...].astype(jnp.float32)
    inv_n = 1.0 / n_total

    s = _lane_group_sum(sum_ref[...][:, 0, :], groups, group_width)     # (TB, TC)
    ss = _lane_group_sum(ssq_ref[...][:, 0, :], groups, group_width)
    mean = s * inv_n
    var = jnp.maximum(ss * inv_n - mean * mean, 0.0)
    inv = jax.lax.rsqrt(var + EPS)

    w = w_ref[...].astype(jnp.float32).reshape(-1)                      # (TC,)
    b = b_ref[...].astype(jnp.float32).reshape(-1)
    scale = inv * w                                                     # (TB, TC)
    shift = b - mean * scale
    o_ref[...] = (a * scale[:, None, :] + shift[:, None, :]).astype(o_ref.dtype)


# --------------------------------------------------------------------------
# Device / tiling plan
# --------------------------------------------------------------------------
def _device_profile():
    """Return (is_megacore_v7x, vmem_limit_bytes) with conservative fallbacks."""
    kind = ""
    try:
        kind = jax.devices()[0].device_kind.lower()
    except Exception:
        pass
    is_v7 = "v7" in kind
    vmem_capacity = None
    try:
        vmem_capacity = int(pltpu.get_tpu_info().vmem_capacity_bytes)
    except Exception:
        vmem_capacity = None
    if vmem_capacity is None:
        # Unknown chip: assume the smallest per-core VMEM (v7x, 64 MiB).
        vmem_capacity = (64 if (is_v7 or not kind) else 128) * 1024 * 1024
    # Leave headroom for compiler-internal scratch; 64 MiB is ample for this op.
    vmem_limit = min(max(vmem_capacity - 16 * 1024 * 1024, 32 * 1024 * 1024),
                     64 * 1024 * 1024)
    return is_v7, vmem_limit


def _plan_tiles(B, M, C, in_itemsize, vmem_limit, is_v7, target_bytes,
                force_two_pass):
    """Pick block sizes.  Returns (mode, tb, tn, tc)."""
    # Budget per block element: 2 double-buffered inputs + double-buffered output
    # (at the I/O dtype) plus ~3 f32 in-kernel temporaries (a, d, out expression).
    per_elem_bytes = 4 * in_itemsize + 2 * in_itemsize + 12
    max_block_elems = max(1, int(vmem_limit * 0.9) // per_elem_bytes)
    # Size blocks by their f32 footprint, independent of the input dtype.
    target_elems = max(1, min(target_bytes // 4, max_block_elems))

    tc_min = 128 if C % 128 == 0 else C
    one_pass_ok = (not force_two_pass) and (M * tc_min <= max_block_elems)

    if one_pass_ok:
        # Channel tiling only if one batch row overflows the target and C is
        # 128-aligned (lane constraint on the BlockSpec).
        tc = C
        if C % 128 == 0 and M * C > target_elems:
            tc = 128
            for cand in range(256, C + 1, 128):
                if C % cand == 0 and M * cand <= target_elems:
                    tc = cand
        per_row = M * tc
        cap = max(1, target_elems // per_row)
        tb = 1
        for cand in range(1, B + 1):
            if B % cand == 0 and cand <= cap:
                tb = cand
        if is_v7:
            # Keep >= 2 grid steps so both v7x TensorCores get work (v7x only;
            # on single-TC v5e/v6e splitting a fits-in-VMEM problem is pure
            # per-step overhead).
            while tb > 1 and (B // tb) * (C // tc) < 2:
                nxt = tb - 1
                while nxt > 1 and B % nxt != 0:
                    nxt -= 1
                tb = nxt
        return "one_pass", tb, None, tc

    # ---- Two-pass fallback: tile the reduction (sequence) axis. ----
    tc = C
    if C % 128 == 0:
        tc = 128
        for cand in range(256, C + 1, 128):
            if C % cand == 0 and min(M, 8) * cand <= target_elems:
                tc = cand
    # tn: largest divisor of M that is a multiple of 8 (or M itself) and fits.
    tn = None
    for cand in range(1, M + 1):
        if M % cand == 0 and (cand % 8 == 0 or cand == M) and cand * tc <= target_elems:
            tn = cand
    if tn is None:
        tn = next((c for c in range(8, M + 1, 8) if M % c == 0), M)
    cap = max(1, target_elems // (tn * tc))
    tb = 1
    for cand in range(1, B + 1):
        if B % cand == 0 and cand <= cap:
            tb = cand
    return "two_pass", tb, tn, tc


# --------------------------------------------------------------------------
# pallas_call wrappers
# --------------------------------------------------------------------------
def _run_one_pass(x1f, x2f, wf, bf, tb, tc, groups, group_width, vmem_limit):
    B, M, C = x1f.shape
    grid = (B // tb, C // tc)
    x_blk = pl.BlockSpec((tb, M, tc), lambda i, j: (i, 0, j))
    par = pl.BlockSpec((1, tc), lambda i, j: (0, j))
    kern = functools.partial(_fused_kernel, groups=groups, group_width=group_width)
    return pl.pallas_call(
        kern,
        out_shape=jax.ShapeDtypeStruct((B, M, C), x1f.dtype),
        grid_spec=pltpu.PrefetchScalarGridSpec(
            num_scalar_prefetch=0,
            grid=grid,
            in_specs=[x_blk, x_blk, par, par],
            out_specs=pl.BlockSpec((tb, M, tc), lambda i, j: (i, 0, j)),
        ),
        compiler_params=pltpu.CompilerParams(
            dimension_semantics=("parallel", "parallel"),
            vmem_limit_bytes=vmem_limit,
        ),
    )(x1f, x2f, wf, bf)


def _run_two_pass(x1f, x2f, wf, bf, tb, tn, tc, groups, group_width, n_total,
                  vmem_limit):
    B, M, C = x1f.shape
    grid = (B // tb, C // tc, M // tn)
    x_blk = pl.BlockSpec((tb, tn, tc), lambda i, j, k: (i, k, j))
    st_blk = pl.BlockSpec((tb, 1, tc), lambda i, j, k: (i, 0, j))
    par = pl.BlockSpec((1, tc), lambda i, j, k: (0, j))

    # Sweep 1: per-(b, c) sum / sumsq accumulated over the N axis (arbitrary).
    sums, ssqs = pl.pallas_call(
        _stats_kernel,
        out_shape=(jax.ShapeDtypeStruct((B, 1, C), jnp.float32),
                   jax.ShapeDtypeStruct((B, 1, C), jnp.float32)),
        grid_spec=pltpu.PrefetchScalarGridSpec(
            num_scalar_prefetch=0,
            grid=grid,
            in_specs=[x_blk, x_blk],
            out_specs=(st_blk, st_blk),
        ),
        compiler_params=pltpu.CompilerParams(
            dimension_semantics=("parallel", "parallel", "arbitrary"),
            vmem_limit_bytes=vmem_limit,
        ),
    )(x1f, x2f)

    # Sweep 2: re-read inputs, normalize, apply affine.
    kern = functools.partial(_apply_kernel, groups=groups,
                             group_width=group_width, n_total=n_total)
    return pl.pallas_call(
        kern,
        out_shape=jax.ShapeDtypeStruct((B, M, C), x1f.dtype),
        grid_spec=pltpu.PrefetchScalarGridSpec(
            num_scalar_prefetch=0,
            grid=grid,
            in_specs=[x_blk, x_blk, st_blk, st_blk, par, par],
            out_specs=pl.BlockSpec((tb, tn, tc), lambda i, j, k: (i, k, j)),
        ),
        compiler_params=pltpu.CompilerParams(
            dimension_semantics=("parallel", "parallel", "parallel"),
            vmem_limit_bytes=vmem_limit,
        ),
    )(x1f, x2f, sums, ssqs, wf, bf)


def add_and_instance_norm(x1, x2, weight, bias, *, force_two_pass=False,
                          target_bytes=None):
    """x1, x2: (B, N, E); weight, bias: (E,). Returns (B, N, E)."""
    B, N, E = x1.shape
    assert x2.shape == (B, N, E)
    assert weight.shape == (E,) and bias.shape == (E,)

    # Lane-dense fold (zero-copy): pack G consecutive sequence positions into the
    # 128-wide lane axis via a contiguous reshape (B, N, E) -> (B, N//G, G*E).
    # NOTE: if E < 128 but not foldable (128 % E != 0 or N % G != 0) the kernel
    # still runs correctly, just with masked (lane-sparse) last-dim stores.
    G = 1
    if E < 128 and 128 % E == 0:
        g = 128 // E
        if N % g == 0:
            G = g
    M, C = N // G, G * E
    x1f = x1.reshape(B, M, C)
    x2f = x2.reshape(B, M, C)
    wf = jnp.tile(weight.astype(jnp.float32), G).reshape(1, C)
    bf = jnp.tile(bias.astype(jnp.float32), G).reshape(1, C)

    is_v7, vmem_limit = _device_profile()
    if target_bytes is None:
        target_bytes = 4 * 1024 * 1024          # ~4 MiB f32 per input block
    mode, tb, tn, tc = _plan_tiles(B, M, C, jnp.dtype(x1.dtype).itemsize,
                                   vmem_limit, is_v7, target_bytes,
                                   force_two_pass)
    if mode == "one_pass":
        out_f = _run_one_pass(x1f, x2f, wf, bf, tb, tc, G, E, vmem_limit)
    else:
        out_f = _run_two_pass(x1f, x2f, wf, bf, tb, tn, tc, G, E, N, vmem_limit)

    return out_f.reshape(B, N, E)               # zero-copy unfold


# --------------------------------------------------------------------------
# Reference + tests
# --------------------------------------------------------------------------
def reference(x1, x2, weight, bias):
    added = x1.astype(jnp.float32) + x2.astype(jnp.float32)   # (B, N, E)
    mean = jnp.mean(added, axis=1, keepdims=True)
    var = jnp.mean((added - mean) ** 2, axis=1, keepdims=True)
    normed = (added - mean) / jnp.sqrt(var + EPS)
    return (normed * weight[None, None, :] + bias[None, None, :]).astype(x1.dtype)


def _run_case(key, B, N, E, **kwargs):
    k1, k2 = jax.random.split(key)
    x1 = jax.random.normal(k1, (B, N, E), dtype=jnp.float32)
    x2 = jax.random.normal(k2, (B, N, E), dtype=jnp.float32)
    # InstanceNorm1d(affine=True): weight, bias of shape (E,).
    weight = 1.0 + 0.01 * jnp.arange(E, dtype=jnp.float32)
    bias = 0.01 * jnp.arange(E, dtype=jnp.float32)

    out = jax.block_until_ready(add_and_instance_norm(x1, x2, weight, bias, **kwargs))
    ref = reference(x1, x2, weight, bias)
    assert out.shape == (B, N, E)
    err = jnp.max(jnp.abs(out - ref))
    assert jnp.allclose(out, ref, atol=1e-4, rtol=1e-4), \
        f"mismatch B={B} N={N} E={E}: max err {err}"


if __name__ == "__main__":
    key = jax.random.PRNGKey(0)
    ka, kb, kc = jax.random.split(key, 3)
    # Lane-sparse embedding (E=32): exercises the zero-copy fold (G=4) + roll-reduce.
    _run_case(ka, B=8, N=16, E=32)
    # Typical POMO embedding (E=128): already lane-dense, no fold.
    _run_case(kb, B=4, N=20, E=128)
    # Force the two-pass (N-tiled) fallback with a tiny block budget to verify it.
    _run_case(kc, B=2, N=64, E=128, force_two_pass=True, target_bytes=16 * 1024)
    print("KERNEL_OK")
</pallas_src>

<mosaic_0001>
module attributes {stable_mosaic.version = 11 : i64} {
  func.func @_fused_kernel(%arg0: i32, %arg1: i32, %arg2: memref<8x4x128xf32, #tpu.memory_space<vmem>>, %arg3: memref<8x4x128xf32, #tpu.memory_space<vmem>>, %arg4: memref<1x128xf32, #tpu.memory_space<vmem>>, %arg5: memref<1x128xf32, #tpu.memory_space<vmem>>, %arg6: memref<8x4x128xf32, #tpu.memory_space<vmem>>) attributes {dimension_semantics = [#tpu.dimension_semantics<parallel>, #tpu.dimension_semantics<parallel>], iteration_bounds = array<i64: 1, 1>, scalar_prefetch = 0 : i64, scratch_operands = 0 : i64, tpu.core_type = #tpu.core_type<tc>, window_params = [{transform_indices = @transform_0, window_bounds = array<i64: 8, 4, 128>}, {transform_indices = @transform_1, window_bounds = array<i64: 8, 4, 128>}, {transform_indices = @transform_2, window_bounds = array<i64: 1, 128>}, {transform_indices = @transform_3, window_bounds = array<i64: 1, 128>}, {transform_indices = @transform_4, window_bounds = array<i64: 8, 4, 128>}]} {
    %c0 = arith.constant 0 : index
    %c0_0 = arith.constant 0 : index
    %c0_1 = arith.constant 0 : index
    %0 = vector.load %arg2[%c0, %c0_0, %c0_1] : memref<8x4x128xf32, #tpu.memory_space<vmem>>, vector<8x4x128xf32>
    %c0_2 = arith.constant 0 : index
    %c0_3 = arith.constant 0 : index
    %c0_4 = arith.constant 0 : index
    %1 = vector.load %arg3[%c0_2, %c0_3, %c0_4] : memref<8x4x128xf32, #tpu.memory_space<vmem>>, vector<8x4x128xf32>
    %2 = arith.addf %0, %1 : vector<8x4x128xf32>
    %cst = arith.constant dense<0.000000e+00> : vector<8x128xf32>
    %3 = vector.multi_reduction <add>, %2, %cst [1] : vector<8x4x128xf32> to vector<8x128xf32>
    %c32_i32 = arith.constant 32 : i32
    %4 = tpu.dynamic_rotate %3 by %c32_i32 dim 1 : vector<8x128xf32>, i32 -> vector<8x128xf32>
    %5 = arith.addf %3, %4 : vector<8x128xf32>
    %c64_i32 = arith.constant 64 : i32
    %6 = tpu.dynamic_rotate %3 by %c64_i32 dim 1 : vector<8x128xf32>, i32 -> vector<8x128xf32>
    %7 = arith.addf %5, %6 : vector<8x128xf32>
    %c96_i32 = arith.constant 96 : i32
    %8 = tpu.dynamic_rotate %3 by %c96_i32 dim 1 : vector<8x128xf32>, i32 -> vector<8x128xf32>
    %9 = arith.addf %7, %8 : vector<8x128xf32>
    %cst_5 = arith.constant 6.250000e-02 : f32
    %10 = vector.broadcast %cst_5 : f32 to vector<8x128xf32>
    %11 = arith.mulf %9, %10 : vector<8x128xf32>
    %12 = vector.shape_cast %11 : vector<8x128xf32> to vector<8x1x128xf32>
    %13 = vector.broadcast %12 : vector<8x1x128xf32> to vector<8x4x128xf32>
    %14 = arith.subf %2, %13 : vector<8x4x128xf32>
    %15 = arith.mulf %14, %14 : vector<8x4x128xf32>
    %cst_6 = arith.constant dense<0.000000e+00> : vector<8x128xf32>
    %16 = vector.multi_reduction <add>, %15, %cst_6 [1] : vector<8x4x128xf32> to vector<8x128xf32>
    %c32_i32_7 = arith.constant 32 : i32
    %17 = tpu.dynamic_rotate %16 by %c32_i32_7 dim 1 : vector<8x128xf32>, i32 -> vector<8x128xf32>
    %18 = arith.addf %16, %17 : vector<8x128xf32>
    %c64_i32_8 = arith.constant 64 : i32
    %19 = tpu.dynamic_rotate %16 by %c64_i32_8 dim 1 : vector<8x128xf32>, i32 -> vector<8x128xf32>
    %20 = arith.addf %18, %19 : vector<8x128xf32>
    %c96_i32_9 = arith.constant 96 : i32
    %21 = tpu.dynamic_rotate %16 by %c96_i32_9 dim 1 : vector<8x128xf32>, i32 -> vector<8x128xf32>
    %22 = arith.addf %20, %21 : vector<8x128xf32>
    %cst_10 = arith.constant 6.250000e-02 : f32
    %23 = vector.broadcast %cst_10 : f32 to vector<8x128xf32>
    %24 = arith.mulf %22, %23 : vector<8x128xf32>
    %cst_11 = arith.constant 9.99999974E-6 : f32
    %25 = vector.broadcast %cst_11 : f32 to vector<8x128xf32>
    %26 = arith.addf %24, %25 : vector<8x128xf32>
    %27 = math.rsqrt %26 : vector<8x128xf32>
    %28 = vector.shape_cast %27 : vector<8x128xf32> to vector<8x1x128xf32>
    %c0_12 = arith.constant 0 : index
    %c0_13 = arith.constant 0 : index
    %29 = vector.load %arg4[%c0_12, %c0_13] : memref<1x128xf32, #tpu.memory_space<vmem>>, vector<1x128xf32>
    %30 = vector.shape_cast %29 : vector<1x128xf32> to vector<1x1x128xf32>
    %c0_14 = arith.constant 0 : index
    %c0_15 = arith.constant 0 : index
    %31 = vector.load %arg5[%c0_14, %c0_15] : memref<1x128xf32, #tpu.memory_space<vmem>>, vector<1x128xf32>
    %32 = vector.shape_cast %31 : vector<1x128xf32> to vector<1x1x128xf32>
    %33 = vector.broadcast %30 : vector<1x1x128xf32> to vector<8x1x128xf32>
    %34 = arith.mulf %28, %33 : vector<8x1x128xf32>
    %35 = vector.broadcast %34 : vector<8x1x128xf32> to vector<8x4x128xf32>
    %36 = arith.mulf %14, %35 : vector<8x4x128xf32>
    %37 = vector.broadcast %32 : vector<1x1x128xf32> to vector<8x4x128xf32>
    %38 = arith.addf %36, %37 : vector<8x4x128xf32>
    %c0_16 = arith.constant 0 : index
    %c0_17 = arith.constant 0 : index
    %c0_18 = arith.constant 0 : index
    %39 = vector.load %arg6[%c0_16, %c0_17, %c0_18] : memref<8x4x128xf32, #tpu.memory_space<vmem>>, vector<8x4x128xf32>
    tpu.vector_store %arg6[%c0_16, %c0_17, %c0_18], %38 {strides = array<i32>} : memref<8x4x128xf32, #tpu.memory_space<vmem>>, vector<8x4x128xf32>,
    return
  }
  func.func @transform_0(%arg0: i32, %arg1: i32) -> (i32, i32, i32) {
    %c0_i32 = arith.constant 0 : i32
    %c0_i32_0 = arith.constant 0 : i32
    return %arg0, %c0_i32, %arg1 : i32, i32, i32
  }
  func.func @transform_1(%arg0: i32, %arg1: i32) -> (i32, i32, i32) {
    %c0_i32 = arith.constant 0 : i32
    %c0_i32_0 = arith.constant 0 : i32
    return %arg0, %c0_i32, %arg1 : i32, i32, i32
  }
  func.func @transform_2(%arg0: i32, %arg1: i32) -> (i32, i32) {
    %c0_i32 = arith.constant 0 : i32
    %c0_i32_0 = arith.constant 0 : i32
    return %c0_i32, %arg1 : i32, i32
  }
  func.func @transform_3(%arg0: i32, %arg1: i32) -> (i32, i32) {
    %c0_i32 = arith.constant 0 : i32
    %c0_i32_0 = arith.constant 0 : i32
    return %c0_i32, %arg1 : i32, i32
  }
  func.func @transform_4(%arg0: i32, %arg1: i32) -> (i32, i32, i32) {
    %c0_i32 = arith.constant 0 : i32
    %c0_i32_0 = arith.constant 0 : i32
    return %arg0, %c0_i32, %arg1 : i32, i32, i32
  }
}

</mosaic_0001>

<llo_original>
// kernel: tpu_custom_call.1
$region0: #{tpu_custom_call.1}
  #allocation0 [shape = 'u32[]', space=smem, size = 0x4, offset = 0x4, fixed_abs, tag = 'smem constant byte address 0x4 - core index']
  #allocation1 [shape = 'u32[144,128]{1,0:T(1,128)}', space=vmem, size = 0x12000, scoped, tag = 'internal scratch']
  %s0 = inlined_call_operand.hbm [shape: f32[8,4,128], index: 0, kind: input, shape index: {}]
  %s1 = inlined_call_operand.hbm [shape: f32[8,4,128], index: 1, kind: input, shape index: {}]
  %s2 = inlined_call_operand.hbm [shape: f32[1,128], index: 2, kind: input, shape index: {}]
  %s3 = inlined_call_operand.hbm [shape: f32[1,128], index: 3, kind: input, shape index: {}]
  %s4 = inlined_call_operand.hbm [shape: f32[8,4,128], index: 4, kind: output, shape index: {}]
  %s5 = sld [smem:[#allocation0]]
  $region42: #{tpu_custom_call.1} parent=0
    _
  %s7 = ssub.s32 1, %s5
  %s8 = scalar_select 0, %s7, %s5
  $region1: #{tpu_custom_call.1} parent=0
    #allocation2 [shape = 'u8[16384]{0}', space=vmem, size = 0x4000, scoped, tag = 'input window, operand 0, single buffered']
    #allocation3 [shape = 's32[1]{0}', space=sflag, size = 0x4, scoped, tag = 'scoped memory for tpu_custom_call.1']
    #allocation4 [shape = 's32[1]{0}', space=sflag, size = 0x4, scoped, tag = 'scoped memory for tpu_custom_call.1']
    #allocation5 [shape = 'u8[16384]{0}', space=vmem, size = 0x4000, scoped, tag = 'input window, operand 1, single buffered']
    #allocation6 [shape = 's32[1]{0}', space=sflag, size = 0x4, scoped, tag = 'scoped memory for tpu_custom_call.1']
    #allocation7 [shape = 'u8[512]{0}', space=vmem, size = 0x400, scoped, tag = 'input window, operand 2, single buffered']
    #allocation8 [shape = 'u8[512]{0}', space=vmem, size = 0x400, scoped, tag = 'input window, operand 3, single buffered']
    #allocation9 [shape = 's32[1]{0}', space=sflag, size = 0x4, scoped, tag = 'scoped memory for tpu_custom_call.1']
    #allocation10 [shape = 'u8[16384]{0}', space=vmem, size = 0x4000, scoped, tag = 'output window, operand 0, single buffered']
    %9 = vsyncpa [#allocation3], 0
    %10 = vsyncpa [#allocation6], 0
    %11 = vsyncpa [#allocation9], 0
    %12 = vsyncpa [#allocation4], 0
    // Predicated region
    $region2: #{tpu_custom_call.1} parent=1 // pred_check
      _
    $region3: #{tpu_custom_call.1} parent=1 // pred_check_branch
      %14 = sbr.rel (0) target = $region5
    $region4: #{tpu_custom_call.1} parent=1 // pred_region
      %s16 = ssub.s32 512, 512
      %17 = vsyncadd [#allocation3], %s16
      %s18 = sshll.u32 [#allocation2], 4
      %s19 = int_to_ptr.vmem [resolvable:$true] %s18
      %24 = dma.hbm_to_vmem [thread:$0]  %s0, 512, %s19, [#allocation3], 64, 64, 4
    $region5: #{tpu_custom_call.1} parent=1 // pred_fallthru
      _
    // Predicated region
    $region6: #{tpu_custom_call.1} parent=1 // pred_check
      _
    $region7: #{tpu_custom_call.1} parent=1 // pred_check_branch
      %26 = sbr.rel (0) target = $region9
    $region8: #{tpu_custom_call.1} parent=1 // pred_region
      %s28 = ssub.s32 512, 512
      %29 = vsyncadd [#allocation6], %s28
      %s30 = sshll.u32 [#allocation5], 4
      %s31 = int_to_ptr.vmem [resolvable:$true] %s30
      %36 = dma.hbm_to_vmem [thread:$0]  %s1, 512, %s31, [#allocation6], 64, 64, 4
    $region9: #{tpu_custom_call.1} parent=1 // pred_fallthru
      _
    // Predicated region
    $region10: #{tpu_custom_call.1} parent=1 // pred_check
      _
    $region11: #{tpu_custom_call.1} parent=1 // pred_check_branch
      %38 = sbr.rel (0) target = $region13
    $region12: #{tpu_custom_call.1} parent=1 // pred_region
      %s40 = ssub.s32 16, 16
      %41 = vsyncadd [#allocation6], %s40
      %s43 = sshll.u32 [#allocation7], 4
      %s44 = int_to_ptr.vmem [resolvable:$true] %s43
      %46 = dma.hbm_to_vmem [thread:$0]  %s2, 16, %s44, [#allocation6]
    $region13: #{tpu_custom_call.1} parent=1 // pred_fallthru
      _
    // Predicated region
    $region14: #{tpu_custom_call.1} parent=1 // pred_check
      _
    $region15: #{tpu_custom_call.1} parent=1 // pred_check_branch
      %48 = sbr.rel (0) target = $region17
    $region16: #{tpu_custom_call.1} parent=1 // pred_region
      %s50 = ssub.s32 16, 16
      %51 = vsyncadd [#allocation9], %s50
      %s53 = sshll.u32 [#allocation8], 4
      %s54 = int_to_ptr.vmem [resolvable:$true] %s53
      %56 = dma.hbm_to_vmem [thread:$0]  %s3, 16, %s54, [#allocation9]
    $region17: #{tpu_custom_call.1} parent=1 // pred_fallthru
      _
    // Predicated region
    $region18: #{tpu_custom_call.1} parent=1 // pred_check
      _
    $region19: #{tpu_custom_call.1} parent=1 // pred_check_branch
      %58 = sbr.rel (0) target = $region21
    $region20: #{tpu_custom_call.1} parent=1 // pred_region
      %59 = dma.done [#allocation3], 512
    $region21: #{tpu_custom_call.1} parent=1 // pred_fallthru
      _
    // Predicated region
    $region22: #{tpu_custom_call.1} parent=1 // pred_check
      _
    $region23: #{tpu_custom_call.1} parent=1 // pred_check_branch
      %61 = sbr.rel (0) target = $region25
    $region24: #{tpu_custom_call.1} parent=1 // pred_region
      %62 = dma.done [#allocation6], 512
    $region25: #{tpu_custom_call.1} parent=1 // pred_fallthru
      _
    // Predicated region
    $region26: #{tpu_custom_call.1} parent=1 // pred_check
      _
    $region27: #{tpu_custom_call.1} parent=1 // pred_check_branch
      %64 = sbr.rel (0) target = $region29
    $region28: #{tpu_custom_call.1} parent=1 // pred_region
      %65 = dma.done [#allocation6], 16
    $region29: #{tpu_custom_call.1} parent=1 // pred_fallthru
      _
    // Predicated region
    $region30: #{tpu_custom_call.1} parent=1 // pred_check
      _
    $region31: #{tpu_custom_call.1} parent=1 // pred_check_branch
      %67 = sbr.rel (0) target = $region33
    $region32: #{tpu_custom_call.1} parent=1 // pred_region
      %68 = dma.done [#allocation9], 16
    $region33: #{tpu_custom_call.1} parent=1 // pred_fallthru
      _
    %v69 = vld [vmem:[#allocation2] sm:$0xf]
    %v70 = vld [vmem:[#allocation2 + $0x4] sm:$0xf]
    %v71 = vld [vmem:[#allocation2 + $0x8] sm:$0xf]
    %v72 = vld [vmem:[#allocation2 + $0xc] sm:$0xf]
    %v73 = vld [vmem:[#allocation2 + $0x10] sm:$0xf]
    %v74 = vld [vmem:[#allocation2 + $0x14] sm:$0xf]
    %v75 = vld [vmem:[#allocation2 + $0x18] sm:$0xf]
    %v76 = vld [vmem:[#allocation2 + $0x1c] sm:$0xf]
    %v77 = vld [vmem:[#allocation5] sm:$0xf]
    %v78 = vld [vmem:[#allocation5 + $0x4] sm:$0xf]
    %v79 = vld [vmem:[#allocation5 + $0x8] sm:$0xf]
    %v80 = vld [vmem:[#allocation5 + $0xc] sm:$0xf]
    %v81 = vld [vmem:[#allocation5 + $0x10] sm:$0xf]
    %v82 = vld [vmem:[#allocation5 + $0x14] sm:$0xf]
    %v83 = vld [vmem:[#allocation5 + $0x18] sm:$0xf]
    %v84 = vld [vmem:[#allocation5 + $0x1c] sm:$0xf]
    %v85 = vadd.f32 %v69, %v77
    %v86 = vadd.f32 %v70, %v78
    %v87 = vadd.f32 %v71, %v79
    %v88 = vadd.f32 %v72, %v80
    %v89 = vadd.f32 %v73, %v81
    %v90 = vadd.f32 %v74, %v82
    %v91 = vadd.f32 %v75, %v83
    %v92 = vadd.f32 %v76, %v84
    %vm93 = vcmask 1043456
    %v94 = vsel %vm93, %v85, 0.0
    %v95 = vrot.slane %v94, 4
    %v96 = vadd.f32 %v94, %v95
    %v97 = vrot.slane %v96, 2
    %v98 = vadd.f32 %v96, %v97
    %v99 = vrot.slane %v98, 1
    %v100 = vadd.f32 %v98, %v99
    %v101 = vsel %vm93, %v86, 0.0
    %v102 = vrot.slane %v101, 4
    %v103 = vadd.f32 %v101, %v102
    %v104 = vrot.slane %v103, 2
    %v105 = vadd.f32 %v103, %v104
    %v106 = vrot.slane %v105, 1
    %v107 = vadd.f32 %v105, %v106
    %v108 = vsel %vm93, %v87, 0.0
    %v109 = vrot.slane %v108, 4
    %v110 = vadd.f32 %v108, %v109
    %v111 = vrot.slane %v110, 2
    %v112 = vadd.f32 %v110, %v111
    %v113 = vrot.slane %v112, 1
    %v114 = vadd.f32 %v112, %v113
    %v115 = vsel %vm93, %v88, 0.0
    %v116 = vrot.slane %v115, 4
    %v117 = vadd.f32 %v115, %v116
    %v118 = vrot.slane %v117, 2
    %v119 = vadd.f32 %v117, %v118
    %v120 = vrot.slane %v119, 1
    %v121 = vadd.f32 %v119, %v120
    %v122 = vsel %vm93, %v89, 0.0
    %v123 = vrot.slane %v122, 4
    %v124 = vadd.f32 %v122, %v123
    %v125 = vrot.slane %v124, 2
    %v126 = vadd.f32 %v124, %v125
    %v127 = vrot.slane %v126, 1
    %v128 = vadd.f32 %v126, %v127
    %v129 = vsel %vm93, %v90, 0.0
    %v130 = vrot.slane %v129, 4
    %v131 = vadd.f32 %v129, %v130
    %v132 = vrot.slane %v131, 2
    %v133 = vadd.f32 %v131, %v132
    %v134 = vrot.slane %v133, 1
    %v135 = vadd.f32 %v133, %v134
    %v136 = vsel %vm93, %v91, 0.0
    %v137 = vrot.slane %v136, 4
    %v138 = vadd.f32 %v136, %v137
    %v139 = vrot.slane %v138, 2
    %v140 = vadd.f32 %v138, %v139
    %v141 = vrot.slane %v140, 1
    %v142 = vadd.f32 %v140, %v141
    %v143 = vsel %vm93, %v92, 0.0
    %v144 = vrot.slane %v143, 4
    %v145 = vadd.f32 %v143, %v144
    %v146 = vrot.slane %v145, 2
    %v147 = vadd.f32 %v145, %v146
    %v148 = vrot.slane %v147, 1
    %v149 = vadd.f32 %v147, %v148
    %vm158 = vcmask 1041409
    %v159 = vsel %vm158, %v107, %v100
    %vm160 = vcmask 1042434
    %v161 = vsel %vm160, %v114, %v159
    %vm162 = vcmask 1043459
    %v163 = vsel %vm162, %v121, %v161
    %vm164 = vcmask 1044484
    %v165 = vsel %vm164, %v128, %v163
    %vm166 = vcmask 1045509
    %v167 = vsel %vm166, %v135, %v165
    %vm168 = vcmask 1046534
    %v169 = vsel %vm168, %v142, %v167
    %vm170 = vcmask 1047559
    %v171 = vsel %vm170, %v149, %v169
    %173 = vrot.lane.b32.xlu0 %v171, 32
    %v174 = vpop.permute.xlu0 %173
    %v176 = vrot.slane %v174, 1
    %v177 = vrot.slane %v174, 2
    %v178 = vrot.slane %v174, 3
    %v179 = vrot.slane %v174, 4
    %v180 = vrot.slane %v174, 5
    %v181 = vrot.slane %v174, 6
    %v182 = vrot.slane %v174, 7
    %v191 = vadd.f32 %v100, %v174
    %v192 = vadd.f32 %v107, %v176
    %v193 = vadd.f32 %v114, %v177
    %v194 = vadd.f32 %v121, %v178
    %v195 = vadd.f32 %v128, %v179
    %v196 = vadd.f32 %v135, %v180
    %v197 = vadd.f32 %v142, %v181
    %v198 = vadd.f32 %v149, %v182
    %199 = vrot.lane.b32.xlu0 %v171, 64
    %v200 = vpop.permute.xlu0 %199
    %v202 = vrot.slane %v200, 1
    %v203 = vrot.slane %v200, 2
    %v204 = vrot.slane %v200, 3
    %v205 = vrot.slane %v200, 4
    %v206 = vrot.slane %v200, 5
    %v207 = vrot.slane %v200, 6
    %v208 = vrot.slane %v200, 7
    %v217 = vadd.f32 %v191, %v200
    %v218 = vadd.f32 %v192, %v202
    %v219 = vadd.f32 %v193, %v203
    %v220 = vadd.f32 %v194, %v204
    %v221 = vadd.f32 %v195, %v205
    %v222 = vadd.f32 %v196, %v206
    %v223 = vadd.f32 %v197, %v207
    %v224 = vadd.f32 %v198, %v208
    %225 = vrot.lane.b32.xlu0 %v171, 96
    %v226 = vpop.permute.xlu0 %225
    %v228 = vrot.slane %v226, 1
    %v229 = vrot.slane %v226, 2
    %v230 = vrot.slane %v226, 3
    %v231 = vrot.slane %v226, 4
    %v232 = vrot.slane %v226, 5
    %v233 = vrot.slane %v226, 6
    %v234 = vrot.slane %v226, 7
    %v243 = vadd.f32 %v217, %v226
    %v244 = vadd.f32 %v218, %v228
    %v245 = vadd.f32 %v219, %v229
    %v246 = vadd.f32 %v220, %v230
    %v247 = vadd.f32 %v221, %v231
    %v248 = vadd.f32 %v222, %v232
    %v249 = vadd.f32 %v223, %v233
    %v250 = vadd.f32 %v224, %v234
    %v251 = vmul.f32 %v243, 0.0625
    %v252 = vmul.f32 %v244, 0.0625
    %v253 = vmul.f32 %v245, 0.0625
    %v254 = vmul.f32 %v246, 0.0625
    %v255 = vmul.f32 %v247, 0.0625
    %v256 = vmul.f32 %v248, 0.0625
    %v257 = vmul.f32 %v249, 0.0625
    %v258 = vmul.f32 %v250, 0.0625
    %v259 = vlaneseq
    %v260 = vshrl.u32 %v259, 7
    %v261 = vsub.s32 0, %v260
    %v262 = vrot.slane %v251, %v261
    %v263 = vlaneseq
    %v264 = vshrl.u32 %v263, 7
    %v265 = vsub.s32 0, %v264
    %v266 = vrot.slane %v252, %v265
    %v267 = vlaneseq
    %v268 = vshrl.u32 %v267, 7
    %v269 = vsub.s32 0, %v268
    %v270 = vrot.slane %v253, %v269
    %v271 = vlaneseq
    %v272 = vshrl.u32 %v271, 7
    %v273 = vsub.s32 0, %v272
    %v274 = vrot.slane %v254, %v273
    %v275 = vlaneseq
    %v276 = vshrl.u32 %v275, 7
    %v277 = vsub.s32 0, %v276
    %v278 = vrot.slane %v255, %v277
    %v279 = vlaneseq
    %v280 = vshrl.u32 %v279, 7
    %v281 = vsub.s32 0, %v280
    %v282 = vrot.slane %v256, %v281
    %v283 = vlaneseq
    %v284 = vshrl.u32 %v283, 7
    %v285 = vsub.s32 0, %v284
    %v286 = vrot.slane %v257, %v285
    %v287 = vlaneseq
    %v288 = vshrl.u32 %v287, 7
    %v289 = vsub.s32 0, %v288
    %v290 = vrot.slane %v258, %v289
    %v291 = vsub.f32 %v85, %v262
    %v292 = vsub.f32 %v86, %v266
    %v293 = vsub.f32 %v87, %v270
    %v294 = vsub.f32 %v88, %v274
    %v295 = vsub.f32 %v89, %v278
    %v296 = vsub.f32 %v90, %v282
    %v297 = vsub.f32 %v91, %v286
    %v298 = vsub.f32 %v92, %v290
    %v299 = vmul.f32 %v291, %v291
    %v300 = vmul.f32 %v292, %v292
    %v301 = vmul.f32 %v293, %v293
    %v302 = vmul.f32 %v294, %v294
    %v303 = vmul.f32 %v295, %v295
    %v304 = vmul.f32 %v296, %v296
    %v305 = vmul.f32 %v297, %v297
    %v306 = vmul.f32 %v298, %v298
    %v307 = vsel %vm93, %v299, 0.0
    %v308 = vrot.slane %v307, 4
    %v309 = vadd.f32 %v307, %v308
    %v310 = vrot.slane %v309, 2
    %v311 = vadd.f32 %v309, %v310
    %v312 = vrot.slane %v311, 1
    %v313 = vadd.f32 %v311, %v312
    %v314 = vsel %vm93, %v300, 0.0
    %v315 = vrot.slane %v314, 4
    %v316 = vadd.f32 %v314, %v315
    %v317 = vrot.slane %v316, 2
    %v318 = vadd.f32 %v316, %v317
    %v319 = vrot.slane %v318, 1
    %v320 = vadd.f32 %v318, %v319
    %v321 = vsel %vm93, %v301, 0.0
    %v322 = vrot.slane %v321, 4
    %v323 = vadd.f32 %v321, %v322
    %v324 = vrot.slane %v323, 2
    %v325 = vadd.f32 %v323, %v324
    %v326 = vrot.slane %v325, 1
    %v327 = vadd.f32 %v325, %v326
    %v328 = vsel %vm93, %v302, 0.0
    %v329 = vrot.slane %v328, 4
    %v330 = vadd.f32 %v328, %v329
    %v331 = vrot.slane %v330, 2
    %v332 = vadd.f32 %v330, %v331
    %v333 = vrot.slane %v332, 1
    %v334 = vadd.f32 %v332, %v333
    %v335 = vsel %vm93, %v303, 0.0
    %v336 = vrot.slane %v335, 4
    %v337 = vadd.f32 %v335, %v336
    %v338 = vrot.slane %v337, 2
    %v339 = vadd.f32 %v337, %v338
    %v340 = vrot.slane %v339, 1
    %v341 = vadd.f32 %v339, %v340
    %v342 = vsel %vm93, %v304, 0.0
    %v343 = vrot.slane %v342, 4
    %v344 = vadd.f32 %v342, %v343
    %v345 = vrot.slane %v344, 2
    %v346 = vadd.f32 %v344, %v345
    %v347 = vrot.slane %v346, 1
    %v348 = vadd.f32 %v346, %v347
    %v349 = vsel %vm93, %v305, 0.0
    %v350 = vrot.slane %v349, 4
    %v351 = vadd.f32 %v349, %v350
    %v352 = vrot.slane %v351, 2
    %v353 = vadd.f32 %v351, %v352
    %v354 = vrot.slane %v353, 1
    %v355 = vadd.f32 %v353, %v354
    %v356 = vsel %vm93, %v306, 0.0
    %v357 = vrot.slane %v356, 4
    %v358 = vadd.f32 %v356, %v357
    %v359 = vrot.slane %v358, 2
    %v360 = vadd.f32 %v358, %v359
    %v361 = vrot.slane %v360, 1
    %v362 = vadd.f32 %v360, %v361
    %v371 = vsel %vm158, %v320, %v313
    %v372 = vsel %vm160, %v327, %v371
    %v373 = vsel %vm162, %v334, %v372
    %v374 = vsel %vm164, %v341, %v373
    %v375 = vsel %vm166, %v348, %v374
    %v376 = vsel %vm168, %v355, %v375
    %v377 = vsel %vm170, %v362, %v376
    %379 = vrot.lane.b32.xlu0 %v377, 32
    %v380 = vpop.permute.xlu0 %379
    %v382 = vrot.slane %v380, 1
    %v383 = vrot.slane %v380, 2
    %v384 = vrot.slane %v380, 3
    %v385 = vrot.slane %v380, 4
    %v386 = vrot.slane %v380, 5
    %v387 = vrot.slane %v380, 6
    %v388 = vrot.slane %v380, 7
    %v397 = vadd.f32 %v313, %v380
    %v398 = vadd.f32 %v320, %v382
    %v399 = vadd.f32 %v327, %v383
    %v400 = vadd.f32 %v334, %v384
    %v401 = vadd.f32 %v341, %v385
    %v402 = vadd.f32 %v348, %v386
    %v403 = vadd.f32 %v355, %v387
    %v404 = vadd.f32 %v362, %v388
    %405 = vrot.lane.b32.xlu0 %v377, 64
    %v406 = vpop.permute.xlu0 %405
    %v408 = vrot.slane %v406, 1
    %v409 = vrot.slane %v406, 2
    %v410 = vrot.slane %v406, 3
    %v411 = vrot.slane %v406, 4
    %v412 = vrot.slane %v406, 5
    %v413 = vrot.slane %v406, 6
    %v414 = vrot.slane %v406, 7
    %v423 = vadd.f32 %v397, %v406
    %v424 = vadd.f32 %v398, %v408
    %v425 = vadd.f32 %v399, %v409
    %v426 = vadd.f32 %v400, %v410
    %v427 = vadd.f32 %v401, %v411
    %v428 = vadd.f32 %v402, %v412
    %v429 = vadd.f32 %v403, %v413
    %v430 = vadd.f32 %v404, %v414
    %431 = vrot.lane.b32.xlu0 %v377, 96
    %v432 = vpop.permute.xlu0 %431
    %v434 = vrot.slane %v432, 1
    %v435 = vrot.slane %v432, 2
    %v436 = vrot.slane %v432, 3
    %v437 = vrot.slane %v432, 4
    %v438 = vrot.slane %v432, 5
    %v439 = vrot.slane %v432, 6
    %v440 = vrot.slane %v432, 7
    %v449 = vadd.f32 %v423, %v432
    %v450 = vadd.f32 %v424, %v434
    %v451 = vadd.f32 %v425, %v435
    %v452 = vadd.f32 %v426, %v436
    %v453 = vadd.f32 %v427, %v437
    %v454 = vadd.f32 %v428, %v438
    %v455 = vadd.f32 %v429, %v439
    %v456 = vadd.f32 %v430, %v440
    %v457 = vmul.f32 %v449, 0.0625
    %v458 = vmul.f32 %v450, 0.0625
    %v459 = vmul.f32 %v451, 0.0625
    %v460 = vmul.f32 %v452, 0.0625
    %v461 = vmul.f32 %v453, 0.0625
    %v462 = vmul.f32 %v454, 0.0625
    %v463 = vmul.f32 %v455, 0.0625
    %v464 = vmul.f32 %v456, 0.0625
    %v465 = vadd.f32 %v457, 1e-05
    %v466 = vadd.f32 %v458, 1e-05
    %v467 = vadd.f32 %v459, 1e-05
    %v468 = vadd.f32 %v460, 1e-05
    %v469 = vadd.f32 %v461, 1e-05
    %v470 = vadd.f32 %v462, 1e-05
    %v471 = vadd.f32 %v463, 1e-05
    %v472 = vadd.f32 %v464, 1e-05
    %v473 = vrsqrt.pop %v465
    %v474 = vrsqrt.pop %v466
    %v475 = vrsqrt.pop %v467
    %v476 = vrsqrt.pop %v468
    %v477 = vrsqrt.pop %v469
    %v478 = vrsqrt.pop %v470
    %v479 = vrsqrt.pop %v471
    %v480 = vrsqrt.pop %v472
    %v481 = vld [vmem:[#allocation7] sm:$0x1]
    %v482 = vld [vmem:[#allocation8] sm:$0x1]
    %v483 = vmul.f32 %v473, %v481
    %v484 = vmul.f32 %v474, %v481
    %v485 = vmul.f32 %v475, %v481
    %v486 = vmul.f32 %v476, %v481
    %v487 = vmul.f32 %v477, %v481
    %v488 = vmul.f32 %v478, %v481
    %v489 = vmul.f32 %v479, %v481
    %v490 = vmul.f32 %v480, %v481
    %v491 = vlaneseq
    %v492 = vshrl.u32 %v491, 7
    %v493 = vsub.s32 0, %v492
    %v494 = vrot.slane %v483, %v493
    %v495 = vlaneseq
    %v496 = vshrl.u32 %v495, 7
    %v497 = vsub.s32 0, %v496
    %v498 = vrot.slane %v484, %v497
    %v499 = vlaneseq
    %v500 = vshrl.u32 %v499, 7
    %v501 = vsub.s32 0, %v500
    %v502 = vrot.slane %v485, %v501
    %v503 = vlaneseq
    %v504 = vshrl.u32 %v503, 7
    %v505 = vsub.s32 0, %v504
    %v506 = vrot.slane %v486, %v505
    %v507 = vlaneseq
    %v508 = vshrl.u32 %v507, 7
    %v509 = vsub.s32 0, %v508
    %v510 = vrot.slane %v487, %v509
    %v511 = vlaneseq
    %v512 = vshrl.u32 %v511, 7
    %v513 = vsub.s32 0, %v512
    %v514 = vrot.slane %v488, %v513
    %v515 = vlaneseq
    %v516 = vshrl.u32 %v515, 7
    %v517 = vsub.s32 0, %v516
    %v518 = vrot.slane %v489, %v517
    %v519 = vlaneseq
    %v520 = vshrl.u32 %v519, 7
    %v521 = vsub.s32 0, %v520
    %v522 = vrot.slane %v490, %v521
    %v523 = vmul.f32 %v291, %v494
    %v524 = vmul.f32 %v292, %v498
    %v525 = vmul.f32 %v293, %v502
    %v526 = vmul.f32 %v294, %v506
    %v527 = vmul.f32 %v295, %v510
    %v528 = vmul.f32 %v296, %v514
    %v529 = vmul.f32 %v297, %v518
    %v530 = vmul.f32 %v298, %v522
    %v532 = vlaneseq
    %v533 = vshrl.u32 %v532, 7
    %v534 = vsub.s32 0, %v533
    %v535 = vrot.slane %v482, %v534
    %v537 = vadd.f32 %v523, %v535
    %v538 = vadd.f32 %v524, %v535
    %v539 = vadd.f32 %v525, %v535
    %v540 = vadd.f32 %v526, %v535
    %v541 = vadd.f32 %v527, %v535
    %v542 = vadd.f32 %v528, %v535
    %v543 = vadd.f32 %v529, %v535
    %v544 = vadd.f32 %v530, %v535
    %545 = vst [vmem:[#allocation10] sm:$0xf] %v537
    %546 = vst [vmem:[#allocation10 + $0x4] sm:$0xf] %v538
    %547 = vst [vmem:[#allocation10 + $0x8] sm:$0xf] %v539
    %548 = vst [vmem:[#allocation10 + $0xc] sm:$0xf] %v540
    %549 = vst [vmem:[#allocation10 + $0x10] sm:$0xf] %v541
    %550 = vst [vmem:[#allocation10 + $0x14] sm:$0xf] %v542
    %551 = vst [vmem:[#allocation10 + $0x18] sm:$0xf] %v543
    %552 = vst [vmem:[#allocation10 + $0x1c] sm:$0xf] %v544
    // Predicated region
    $region34: #{tpu_custom_call.1} parent=1 // pred_check
      _
    $region35: #{tpu_custom_call.1} parent=1 // pred_check_branch
      %554 = sbr.rel (0) target = $region37
    $region36: #{tpu_custom_call.1} parent=1 // pred_region
      %s556 = ssub.s32 512, 512
      %557 = vsyncadd [#allocation4], %s556
      %s558 = sshll.u32 [#allocation10], 4
      %s559 = int_to_ptr.vmem [resolvable:$true] %s558
      %564 = dma.vmem_to_hbm [thread:$0]  %s559, 512, %s4, [#allocation4], 64, 64, 4
    $region37: #{tpu_custom_call.1} parent=1 // pred_fallthru
      _
    // Predicated region
    $region38: #{tpu_custom_call.1} parent=1 // pred_check
      _
    $region39: #{tpu_custom_call.1} parent=1 // pred_check_branch
      %566 = sbr.rel (0) target = $region41
    $region40: #{tpu_custom_call.1} parent=1 // pred_region
      %567 = dma.done [#allocation4], 512
    $region41: #{tpu_custom_call.1} parent=1 // pred_fallthru
      _
    %568 = vsyncpa [#allocation3], 1
    %569 = vsyncpa [#allocation6], 1
    %570 = vsyncpa [#allocation9], 1
    %571 = vsyncpa [#allocation4], 1

</llo_original>
